<compile_context>
chip_gen: v6e
topology: v6e:2x2x1
jax: 0.10.0
libtpu: 0.0.40
codegen_flags: <defaults>
</compile_context>

<pallas_src>
import functools

import jax
import jax.numpy as jnp
from jax.experimental import pallas as pl
from jax.experimental.pallas import tpu as pltpu

_LANES = 128
_LANE_WIDTHS = (4096, 2048, 1024, 512, 256, 128)
_SQRT_2_INV = 0.7071067811865476
_GELU_TANH_C = 0.7978845608028654  # sqrt(2/pi)
_SUPPORTED = ("tanh", "relu", "gelu", "sigmoid")


def _cdiv(a: int, b: int) -> int:
    return -(-a // b)


def _round_up(v: int, m: int) -> int:
    return _cdiv(v, m) * m


def _apply_activation(x, activation: str, gelu_approximate: bool = False):
    if activation == "tanh":
        return jnp.tanh(x)
    if activation == "relu":
        return jnp.maximum(x, 0.0)
    if activation == "gelu":
        if gelu_approximate:
            # tanh approximation: one EUP op instead of the exact-erf VALU polynomial
            # (v7x headroom protection; nn.GELU() default is the exact form below).
            return 0.5 * x * (1.0 + jnp.tanh(_GELU_TANH_C * (x + 0.044715 * x * x * x)))
        # nn.GELU default = exact erf formulation (kept for parity with PyTorch).
        return 0.5 * x * (1.0 + jax.lax.erf(x * _SQRT_2_INV))
    if activation == "sigmoid":
        return jax.nn.sigmoid(x)
    raise ValueError("Activation function not supported")


def _activation_kernel(x_ref, o_ref, *, activation, compute_dtype, gelu_approximate):
    x = x_ref[...]
    if compute_dtype is not None and x.dtype != compute_dtype:
        x = x.astype(compute_dtype)
    o_ref[...] = _apply_activation(x, activation, gelu_approximate).astype(o_ref.dtype)


def _target_block_bytes() -> int:
    # v5e (and unknown/older gens): 16 MiB scoped-VMEM default -> ~2 MiB blocks
    # (2 in + 2 out, double-buffered = 8 MiB). v6e/v7x: 32 MiB scoped default ->
    # ~4 MiB blocks (16 MiB double-buffered) to halve per-grid-step overhead.
    try:
        kind = jax.devices()[0].device_kind.lower()
    except Exception:  # pragma: no cover - defensive only
        kind = ""
    if "v6" in kind or "v7" in kind or "7x" in kind:
        return 4 * 1024 * 1024
    return 2 * 1024 * 1024


def _sublane_multiple(itemsize: int) -> int:
    # Packed-sublane multiple: one vreg holds [8,128] f32, [16,128] bf16, [32,128] int8.
    return {4: 8, 2: 16, 1: 32}.get(itemsize, 8)


def _choose_layout(n: int, itemsize: int, sublane_mult: int, block_bytes: int):
    """Pick (lane_width, rows, tile_rows) for a lane-dense 2D slab of n elements."""
    # Prefer the widest lane dimension that still leaves >= 4 row-tiles
    # (>= 2 grid steps per v7x TensorCore); fall back to >= 2 tiles, then widest divisor.
    width = None
    for min_tiles in (4, 2):
        for w in _LANE_WIDTHS:
            if n % w == 0 and (n // w) >= min_tiles * sublane_mult:
                width = w
                break
        if width is not None:
            break
    if width is None:
        for w in _LANE_WIDTHS:
            if n % w == 0:
                width = w
                break
    assert width is not None  # caller guarantees n % 128 == 0
    rows = n // width

    # Row tile sized for ~block_bytes per block, rounded to the packed-sublane multiple.
    tile_rows = max(sublane_mult, block_bytes // (width * itemsize))
    tile_rows = (tile_rows // sublane_mult) * sublane_mult

    # Guarantee >= 4 grid steps (>= 2 per v7x TC) when rows allow, else >= 2 steps.
    if rows >= 4 * sublane_mult:
        tile_rows = min(tile_rows, _round_up(_cdiv(rows, 4), sublane_mult))
    elif rows >= 2 * sublane_mult:
        tile_rows = min(tile_rows, _round_up(_cdiv(rows, 2), sublane_mult))

    if tile_rows >= rows:
        # Full-extent block (allowed even if rows % sublane_mult != 0).
        return width, rows, rows

    # Prefer an even total step count so the two v7x TensorCores stay balanced.
    steps = _cdiv(rows, tile_rows)
    if steps > 1 and steps % 2 == 1:
        for cand in (_round_up(_cdiv(rows, steps + 1), sublane_mult),
                     tile_rows - sublane_mult):
            if sublane_mult <= cand < rows and _cdiv(rows, cand) % 2 == 0:
                tile_rows = cand
                break
    return width, rows, tile_rows


def _run_2d(x2d, *, activation, rows, width, tile_rows, compute_dtype,
            gelu_approximate, donate):
    grid = (_cdiv(rows, tile_rows),)  # cdiv: partial last block masked by Pallas
    kernel = functools.partial(_activation_kernel, activation=activation,
                               compute_dtype=compute_dtype,
                               gelu_approximate=gelu_approximate)
    return pl.pallas_call(
        kernel,
        out_shape=jax.ShapeDtypeStruct((rows, width), x2d.dtype),
        grid_spec=pl.GridSpec(
            grid=grid,
            in_specs=[pl.BlockSpec((tile_rows, width), lambda i: (i, 0))],
            out_specs=pl.BlockSpec((tile_rows, width), lambda i: (i, 0)),
        ),
        compiler_params=pltpu.CompilerParams(
            dimension_semantics=("parallel",),
        ),
        input_output_aliases=({0: 0} if donate else {}),
    )(x2d)


def activation_function(x: jax.Array, activation: str, *,
                        gelu_approximate: bool = False,
                        donate: bool = False) -> jax.Array:
    """Pallas equivalent of ActivationFunction(activation)(x) for arbitrary shapes."""
    if activation not in _SUPPORTED:
        raise ValueError("Activation function not supported")

    orig_shape = x.shape
    n = x.size
    if n == 0:
        return x

    dtype = jnp.dtype(x.dtype)
    itemsize = dtype.itemsize
    sublane_mult = _sublane_multiple(itemsize)
    block_bytes = _target_block_bytes()

    # Transcendental activations on sub-f32 floats run in f32 inside the kernel
    # (free here — memory bound — and tightens parity with the PyTorch reference).
    compute_dtype = None
    if activation != "relu" and jnp.issubdtype(dtype, jnp.floating) and itemsize < 4:
        compute_dtype = jnp.float32

    run = functools.partial(_run_2d, activation=activation,
                            compute_dtype=compute_dtype,
                            gelu_approximate=gelu_approximate)

    if n % _LANES == 0:
        # Common case: zero wrapper-side copies — free reshape into a lane-dense slab.
        width, rows, tile_rows = _choose_layout(n, itemsize, sublane_mult, block_bytes)
        out2d = run(x.reshape(rows, width), rows=rows, width=width,
                    tile_rows=tile_rows, donate=donate)
        return out2d.reshape(orig_shape)

    # Ragged (n % 128 != 0, uncommon): main kernel on the lane-aligned prefix plus a
    # tiny (<128-element) padded kernel on the tail, instead of padding/slicing the
    # entire flat array.
    # TODO(synk): fully copy-free join (the concatenate still rewrites the output once).
    x_flat = x.reshape(-1)
    n_main = (n // _LANES) * _LANES
    rem = n - n_main
    pieces = []
    if n_main:
        width, rows, tile_rows = _choose_layout(n_main, itemsize, sublane_mult,
                                                block_bytes)
        out_main = run(x_flat[:n_main].reshape(rows, width), rows=rows, width=width,
                       tile_rows=tile_rows, donate=False)
        pieces.append(out_main.reshape(-1))
    tail = jnp.pad(x_flat[n_main:], (0, _LANES - rem)).reshape(1, _LANES)
    out_tail = run(tail, rows=1, width=_LANES, tile_rows=1, donate=False)
    pieces.append(out_tail.reshape(-1)[:rem])
    out_flat = pieces[0] if len(pieces) == 1 else jnp.concatenate(pieces)
    return out_flat.reshape(orig_shape)


if __name__ == "__main__":
    key = jax.random.PRNGKey(0)
    # NCHW-like input, as the PyTorch forward would see it.
    x = jax.random.normal(key, (2, 4, 16, 16), dtype=jnp.float32)

    for act in _SUPPORTED:
        y = activation_function(x, act)
        jax.block_until_ready(y)
        y_ref = _apply_activation(x, act)
        assert y.shape == x.shape and y.dtype == x.dtype
        assert jnp.max(jnp.abs(y - y_ref)) < 1e-5, f"mismatch for {act}"

    # bf16 path (f32 in-kernel compute, 16-row packed-sublane tiles).
    xb = x.astype(jnp.bfloat16)
    yb = activation_function(xb, "gelu")
    jax.block_until_ready(yb)
    yb_ref = _apply_activation(xb.astype(jnp.float32), "gelu").astype(jnp.bfloat16)
    assert yb.shape == xb.shape and yb.dtype == jnp.bfloat16
    assert jnp.max(jnp.abs(yb.astype(jnp.float32) -
                           yb_ref.astype(jnp.float32))) < 2e-2, "mismatch for bf16 gelu"

    # Ragged path (numel % 128 != 0): aligned prefix + tiny tail kernel.
    xr = jax.random.normal(jax.random.PRNGKey(1), (3, 5, 13), dtype=jnp.float32)
    yr = activation_function(xr, "tanh")
    jax.block_until_ready(yr)
    assert yr.shape == xr.shape
    assert jnp.max(jnp.abs(yr - jnp.tanh(xr))) < 1e-5, "mismatch for ragged tanh"

    print("KERNEL_OK")
</pallas_src>

<mosaic_0001>
module attributes {stable_mosaic.version = 11 : i64} {
  func.func @_activation_kernel(%arg0: i32, %arg1: memref<8x128xf32, #tpu.memory_space<vmem>>, %arg2: memref<8x128xf32, #tpu.memory_space<vmem>>) attributes {dimension_semantics = [#tpu.dimension_semantics<parallel>], iteration_bounds = array<i64: 2>, scalar_prefetch = 0 : i64, scratch_operands = 0 : i64, tpu.core_type = #tpu.core_type<tc>, window_params = [{transform_indices = @transform_0, window_bounds = array<i64: 8, 128>}, {transform_indices = @transform_1, window_bounds = array<i64: 8, 128>}]} {
    %c0 = arith.constant 0 : index
    %c0_0 = arith.constant 0 : index
    %0 = vector.load %arg1[%c0, %c0_0] : memref<8x128xf32, #tpu.memory_space<vmem>>, vector<8x128xf32>
    %1 = math.tanh %0 : vector<8x128xf32>
    %c0_1 = arith.constant 0 : index
    %c0_2 = arith.constant 0 : index
    %2 = vector.load %arg2[%c0_1, %c0_2] : memref<8x128xf32, #tpu.memory_space<vmem>>, vector<8x128xf32>
    tpu.vector_store %arg2[%c0_1, %c0_2], %1 {strides = array<i32>} : memref<8x128xf32, #tpu.memory_space<vmem>>, vector<8x128xf32>,
    return
  }
  func.func @transform_0(%arg0: i32) -> (i32, i32) {
    %c0_i32 = arith.constant 0 : i32
    %c0_i32_0 = arith.constant 0 : i32
    return %arg0, %c0_i32 : i32, i32
  }
  func.func @transform_1(%arg0: i32) -> (i32, i32) {
    %c0_i32 = arith.constant 0 : i32
    %c0_i32_0 = arith.constant 0 : i32
    return %arg0, %c0_i32 : i32, i32
  }
}

</mosaic_0001>

<llo_original>
// kernel: tpu_custom_call.1
$region0: #{tpu_custom_call.1}
  #allocation0 [shape = 'u32[]', space=smem, size = 0x4, offset = 0x4, fixed_abs, tag = 'smem constant byte address 0x4 - core index']
  #allocation1 [shape = 'u32[144,128]{1,0:T(1,128)}', space=vmem, size = 0x12000, scoped, tag = 'internal scratch']
  %s0 = inlined_call_operand.hbm [shape: f32[16,128], index: 0, kind: input, shape index: {}]
  %s1 = inlined_call_operand.hbm [shape: f32[16,128], index: 1, kind: output, shape index: {}]
  %s2 = sld [smem:[#allocation0]]
  $region41: #{tpu_custom_call.1} parent=0
    _
  %s4 = ssub.s32 1, %s2
  %s5 = scalar_select 0, %s4, %s2
  $region1: #{tpu_custom_call.1} parent=0
    #allocation2 [shape = 'u8[8192]{0}', space=vmem, size = 0x2000, scoped, tag = 'input window, operand 0']
    #allocation3 [shape = 's32[2]{0}', space=sflag, size = 0x8, scoped, tag = 'scoped memory for tpu_custom_call.1']
    #allocation4 [shape = 's32[2]{0}', space=sflag, size = 0x8, scoped, tag = 'scoped memory for tpu_custom_call.1']
    #allocation5 [shape = 'u8[8192]{0}', space=vmem, size = 0x2000, scoped, tag = 'output window, operand 0']
    %6 = vsyncpa [#allocation3], 0
    %s7 = scalar_lea.sflag [#allocation3], 1
    %8 = vsyncpa %s7, 0
    %9 = vsyncpa [#allocation4], 0
    %s10 = scalar_lea.sflag [#allocation4], 1
    %11 = vsyncpa %s10, 0
    loop: start=0, step=1, limit=4
    $region2: #{tpu_custom_call.1} parent=1 // loop_pre_header
      _
    $region3: #{tpu_custom_call.1} parent=1 // loop_header
      %s13 = sphi 0, %s17
      %p14 = scmp.ge.s32.totalorder %s13, 4
      %s23 = sphi 0, %s25
      %s26 = sphi 0, %s23
      %s27 = sphi 0, %s26
      %s43 = sphi 0, %s27
      %s49 = sphi 0, %s51
      %s52 = sphi 0, %s49
      %s53 = sphi 0, %s52
      %s69 = sphi 0, %s53
    $region4: #{tpu_custom_call.1} parent=1 // loop_header_branch
      %16 = sbr.rel (%p14) target = $region8
    $region5: #{tpu_custom_call.1} parent=1 // loop_body
      %s18 = ssub.s32 %s13, 1
      %s19 = ssub.s32 %s13, 2
      %s20 = sadd.s32 %s13, 1
      %s21 = ssub.s32 %s13, %s20
      %p22 = scmp.eq.s32.totalorder %s21, 0
      %s24 = sadd.s32 %s23, 1
      %s25 = scalar_select %p22, %s23, %s24
      %p28 = pneg %p22
      %p29 = scmp.eq.s32.totalorder %s13, 1
      %p30 = por %p28, %p29
      %p31 = scmp.ne.s32.totalorder %s23, %s26
      %p32 = scmp.eq.s32.totalorder %s13, 0
      %p33 = por %p31, %p32
      %p34 = scmp.ne.s32.totalorder %s23, %s26
      %p35 = scmp.eq.s32.totalorder %s18, 1
      %p36 = por %p34, %p35
      %p37 = scmp.ne.s32.totalorder %s26, %s27
      %p38 = scmp.eq.s32.totalorder %s18, 0
      %p39 = por %p37, %p38
      %p40 = scmp.ne.s32.totalorder %s26, %s27
      %p41 = scmp.eq.s32.totalorder %s19, 1
      %p42 = por %p40, %p41
      %p44 = scmp.ne.s32.totalorder %s27, %s43
      %p45 = scmp.eq.s32.totalorder %s19, 0
      %p46 = por %p44, %p45
      %s47 = ssub.s32 %s13, %s20
      %p48 = scmp.eq.s32.totalorder %s47, 0
      %s50 = sadd.s32 %s49, 1
      %s51 = scalar_select %p48, %s49, %s50
      %p54 = pneg %p48
      %p55 = scmp.eq.s32.totalorder %s13, 1
      %p56 = por %p54, %p55
      %p57 = scmp.ne.s32.totalorder %s49, %s52
      %p58 = scmp.eq.s32.totalorder %s13, 0
      %p59 = por %p57, %p58
      %p60 = scmp.ne.s32.totalorder %s49, %s52
      %p61 = scmp.eq.s32.totalorder %s18, 1
      %p62 = por %p60, %p61
      %p63 = scmp.ne.s32.totalorder %s52, %s53
      %p64 = scmp.eq.s32.totalorder %s18, 0
      %p65 = por %p63, %p64
      %p66 = scmp.ne.s32.totalorder %s52, %s53
      %p67 = scmp.eq.s32.totalorder %s19, 1
      %p68 = por %p66, %p67
      %p70 = scmp.ne.s32.totalorder %s53, %s69
      %p71 = scmp.eq.s32.totalorder %s19, 0
      %p72 = por %p70, %p71
      %p73 = scmp.le.s32.totalorder 1, %s13
      %p74 = scmp.lt.s32.totalorder %s13, 3
      %p75 = pnand %p73, %p74
      %p76 = pneg %p75
      // Predicated region
      $region9: #{tpu_custom_call.1} parent=5 // pred_check
        _
      $region10: #{tpu_custom_call.1} parent=5 // pred_check_branch
        %78 = sbr.rel (%p75) target = $region12
      $region11: #{tpu_custom_call.1} parent=5 // pred_region
        %s79 = ssub.s32 %s13, 1
      $region12: #{tpu_custom_call.1} parent=5 // pred_fallthru
        _
      %p80 = scmp.lt.s32.totalorder %s13, 2
      // Predicated region
      $region13: #{tpu_custom_call.1} parent=5 // pred_check
        %p81 = pneg %p80
      $region14: #{tpu_custom_call.1} parent=5 // pred_check_branch
        %83 = sbr.rel (%p81) target = $region16
      $region15: #{tpu_custom_call.1} parent=5 // pred_region
        // Predicated region
        $region17: #{tpu_custom_call.1} parent=15 // pred_check
          %p84 = pneg %p33
        $region18: #{tpu_custom_call.1} parent=15 // pred_check_branch
          %86 = sbr.rel (%p84) target = $region20
        $region19: #{tpu_custom_call.1} parent=15 // pred_region
          %s87 = sand.u32 %s23, 1
          %s88 = scalar_lea.sflag [#allocation3], %s87
          %s89 = sand.u32 %s23, 1
          %s90 = smul.addr %s89, 8
          %s91 = scalar_lea.vmem [#allocation2], %s90
          %s93 = ssub.s32 128, 128
          %94 = vsyncadd %s88, %s93
          %s95 = smul.addr %s13, 128
          %s96 = scalar_lea.hbm %s0, %s95
          %s98 = sshll.u32 %s91, 4
          %s99 = int_to_ptr.vmem [resolvable:$true] %s98
          %101 = dma.hbm_to_vmem [thread:$0]  %s96, 128, %s99, %s88
        $region20: #{tpu_custom_call.1} parent=15 // pred_fallthru
          _
      $region16: #{tpu_custom_call.1} parent=5 // pred_fallthru
        _
      %p102 = scmp.le.s32.totalorder 1, %s13
      %p103 = scmp.lt.s32.totalorder %s13, 3
      %p104 = pnand %p102, %p103
      %p105 = pneg %p104
      // Predicated region
      $region21: #{tpu_custom_call.1} parent=5 // pred_check
        _
      $region22: #{tpu_custom_call.1} parent=5 // pred_check_branch
        %107 = sbr.rel (%p104) target = $region24
      $region23: #{tpu_custom_call.1} parent=5 // pred_region
        %s108 = ssub.s32 %s13, 1
        %s109 = sand.u32 %s26, 1
        %s110 = scalar_lea.sflag [#allocation3], %s109
        %s111 = sand.u32 %s26, 1
        %s112 = smul.addr %s111, 8
        %s113 = scalar_lea.vmem [#allocation2], %s112
        // Predicated region
        $region25: #{tpu_custom_call.1} parent=23 // pred_check
          %p114 = pneg %p39
        $region26: #{tpu_custom_call.1} parent=23 // pred_check_branch
          %116 = sbr.rel (%p114) target = $region28
        $region27: #{tpu_custom_call.1} parent=23 // pred_region
          %117 = dma.done %s110, 128
        $region28: #{tpu_custom_call.1} parent=23 // pred_fallthru
          _
        %s118 = sand.u32 %s26, 1
        %s119 = scalar_lea.sflag [#allocation3], %s118
        %s120 = sand.u32 %s26, 1
        %s121 = smul.addr %s120, 8
        %s122 = scalar_lea.vmem [#allocation2], %s121
        %p123 = pneg %p39
        %p124 = pneg %p36
        %p125 = pneg %p65
        %p126 = pneg %p62
        %s127 = sand.u32 %s52, 1
        %s128 = scalar_lea.sflag [#allocation4], %s127
        %s129 = sand.u32 %s52, 1
        %s130 = smul.addr %s129, 8
        %s131 = scalar_lea.vmem [#allocation5], %s130
        %v132 = vld [vmem:[%s113] sm:$0xff]
        %v133 = vtanh.pop %v132
        %134 = vst [vmem:[%s131] sm:$0xff] %v133
        %s135 = sand.u32 %s52, 1
        %s136 = scalar_lea.sflag [#allocation4], %s135
        %s137 = sand.u32 %s52, 1
        %s138 = smul.addr %s137, 8
        %s139 = scalar_lea.vmem [#allocation5], %s138
        // Predicated region
        $region29: #{tpu_custom_call.1} parent=23 // pred_check
          %p140 = pneg %p62
        $region30: #{tpu_custom_call.1} parent=23 // pred_check_branch
          %142 = sbr.rel (%p140) target = $region32
        $region31: #{tpu_custom_call.1} parent=23 // pred_region
          %s144 = ssub.s32 128, 128
          %145 = vsyncadd %s136, %s144
          %s146 = smul.addr %s18, 128
          %s147 = scalar_lea.hbm %s1, %s146
          %s149 = sshll.u32 %s139, 4
          %s150 = int_to_ptr.vmem [resolvable:$true] %s149
          %152 = dma.vmem_to_hbm [thread:$0]  %s150, 128, %s147, %s136
        $region32: #{tpu_custom_call.1} parent=23 // pred_fallthru
          _
      $region24: #{tpu_custom_call.1} parent=5 // pred_fallthru
        _
      %p153 = scmp.le.s32.totalorder 2, %s13
      // Predicated region
      $region33: #{tpu_custom_call.1} parent=5 // pred_check
        %p154 = pneg %p153
      $region34: #{tpu_custom_call.1} parent=5 // pred_check_branch
        %156 = sbr.rel (%p154) target = $region36
      $region35: #{tpu_custom_call.1} parent=5 // pred_region
        %s157 = ssub.s32 %s13, 2
        // Predicated region
        $region37: #{tpu_custom_call.1} parent=35 // pred_check
          %p158 = pneg %p68
        $region38: #{tpu_custom_call.1} parent=35 // pred_check_branch
          %160 = sbr.rel (%p158) target = $region40
        $region39: #{tpu_custom_call.1} parent=35 // pred_region
          %s161 = sand.u32 %s53, 1
          %s162 = scalar_lea.sflag [#allocation4], %s161
          %s163 = sand.u32 %s53, 1
          %s164 = smul.addr %s163, 8
          %s165 = scalar_lea.vmem [#allocation5], %s164
          %166 = dma.done %s162, 128
        $region40: #{tpu_custom_call.1} parent=35 // pred_fallthru
          _
      $region36: #{tpu_custom_call.1} parent=5 // pred_fallthru
        _
    $region6: #{tpu_custom_call.1} parent=1 // loop_footer
      %s17 = sadd.s32 1, %s13
    $region7: #{tpu_custom_call.1} parent=1 // loop_footer_branch
      %12 = sbr.rel target = $region3
    $region8: #{tpu_custom_call.1} parent=1 // loop_exit
      _
    %167 = vsyncpa [#allocation3], 1
    %s168 = scalar_lea.sflag [#allocation3], 1
    %169 = vsyncpa %s168, 1
    %170 = vsyncpa [#allocation4], 1
    %s171 = scalar_lea.sflag [#allocation4], 1
    %172 = vsyncpa %s171, 1

</llo_original>
